<compile_context>
chip_gen: v6e
topology: v6e:2x2x1
jax: 0.10.0
libtpu: 0.0.40
codegen_flags: <defaults>
</compile_context>

<pallas_src>
import jax
import jax.numpy as jnp
from jax.experimental import pallas as pl
from jax.experimental.pallas import tpu as pltpu


def _norm_kernel(x_ref, mean_ref, inv_std_ref, o_ref):
    # x_ref: (TB, F); mean_ref / inv_std_ref: (1, F), broadcast over rows.
    x = x_ref[...].astype(jnp.float32)
    o_ref[...] = ((x - mean_ref[...]) * inv_std_ref[...]).astype(o_ref.dtype)


def _vmem_budget_and_limit():
    """Generation-aware (live-tile budget, scoped-VMEM limit) in bytes."""
    phys = 128 * 1024 * 1024
    try:
        phys = int(pltpu.get_tpu_info().vmem_capacity_bytes)
    except Exception:
        pass
    if phys >= 96 * 1024 * 1024:
        # v5e / v6e: 128 MiB physical VMEM -> large tiles, raised scoped limit.
        return 48 * 1024 * 1024, 64 * 1024 * 1024
    # v7x: 64 MiB physical VMEM per TC -> tighter budget.
    return 24 * 1024 * 1024, 32 * 1024 * 1024


def _choose_block_rows(n_rows, n_cols, in_itemsize, out_itemsize, budget):
    """Row tile: as large as the VMEM budget allows, sublane-aligned, >=2 steps."""
    # Sublane alignment: 8 rows for 32-bit, 16 for 16-bit, 32 for 8-bit dtypes.
    min_rows = 8 if in_itemsize >= 4 else (16 if in_itemsize == 2 else 32)
    if n_rows < min_rows:
        return n_rows  # full-extent block, exempt from the (8,128) rule
    # Live VMEM ~= double-buffered input tile + double-buffered output tile.
    bytes_per_row = 2 * (in_itemsize + out_itemsize) * n_cols
    tb = max(min_rows, (budget // bytes_per_row) // min_rows * min_rows)
    # If everything fits in one tile, split into >=2 steps so the "parallel"
    # row axis can actually shard across the 2 TensorCores (v7x / megacore).
    if tb >= n_rows and n_rows > min_rows:
        half = ((n_rows + 1) // 2 + min_rows - 1) // min_rows * min_rows
        tb = max(min_rows, min(half, tb))
    return min(tb, n_rows)


def normalization(x, means, stds):
    """Pallas TPU implementation of Normalization.forward: (x - means) * (1/stds)."""
    orig_shape = x.shape
    feat = orig_shape[-1]
    n_rows = 1
    for d in orig_shape[:-1]:
        n_rows *= d

    # PyTorch promotes x against the f32 buffers, so the result is >= f32.
    out_dtype = jnp.promote_types(x.dtype, jnp.float32)

    x2 = x.reshape(n_rows, feat)
    means2 = means.astype(jnp.float32).reshape(1, feat)
    inv_stds2 = (1.0 / stds.astype(jnp.float32)).reshape(1, feat)

    # Lane-dense layout: fold 128/F logical rows into one 128-wide lane row
    # when F is a small divisor of 128 (avoids masked partial stores).
    n_rows_eff, feat_eff = n_rows, feat
    if feat < 128 and 128 % feat == 0:
        r = 128 // feat
        if r > 1 and n_rows % r == 0:
            n_rows_eff, feat_eff = n_rows // r, feat * r
            x2 = x2.reshape(n_rows_eff, feat_eff)
            means2 = jnp.tile(means2, (1, r))
            inv_stds2 = jnp.tile(inv_stds2, (1, r))

    budget, vmem_limit = _vmem_budget_and_limit()
    tb = _choose_block_rows(
        n_rows_eff,
        feat_eff,
        jnp.dtype(x.dtype).itemsize,
        jnp.dtype(out_dtype).itemsize,
        budget,
    )
    grid = (pl.cdiv(n_rows_eff, tb),)

    out = pl.pallas_call(
        _norm_kernel,
        out_shape=jax.ShapeDtypeStruct((n_rows_eff, feat_eff), out_dtype),
        grid_spec=pltpu.PrefetchScalarGridSpec(
            num_scalar_prefetch=0,
            grid=grid,
            in_specs=[
                pl.BlockSpec((tb, feat_eff), lambda i: (i, 0)),
                pl.BlockSpec((1, feat_eff), lambda i: (0, 0)),  # resident across grid
                pl.BlockSpec((1, feat_eff), lambda i: (0, 0)),  # resident across grid
            ],
            out_specs=pl.BlockSpec((tb, feat_eff), lambda i: (i, 0)),
        ),
        compiler_params=pltpu.CompilerParams(
            dimension_semantics=("parallel",),
            vmem_limit_bytes=vmem_limit,
        ),
    )(x2, means2, inv_stds2)
    return out.reshape(orig_shape)


def _reference(x, means, stds):
    return (x.astype(jnp.float32) - means.astype(jnp.float32)) * (
        1.0 / stds.astype(jnp.float32)
    )


if __name__ == "__main__":
    key = jax.random.PRNGKey(0)
    kx, km, ks, kx3, kx4 = jax.random.split(key, 5)

    F = 128
    means = jax.random.normal(km, (F,), dtype=jnp.float32)
    stds = jax.random.uniform(ks, (F,), minval=0.5, maxval=2.0, dtype=jnp.float32)

    # 2D: batch=16, hidden=128 (lane-aligned).
    x = jax.random.normal(kx, (16, F), dtype=jnp.float32)
    out = normalization(x, means, stds)
    jax.block_until_ready(out)
    ref = _reference(x, means, stds)
    assert out.shape == ref.shape and out.dtype == ref.dtype
    assert jnp.allclose(out, ref, atol=1e-6, rtol=1e-6), "mismatch (2D input)"

    # 3D with a row count (3*7=21) that is NOT a multiple of the tile -> ragged grid.
    x3 = jax.random.normal(kx3, (3, 7, F), dtype=jnp.float32)
    out3 = normalization(x3, means, stds)
    jax.block_until_ready(out3)
    ref3 = _reference(x3, means, stds)
    assert jnp.allclose(out3, ref3, atol=1e-6, rtol=1e-6), "mismatch (ragged 3D input)"

    # Small feature dim (F=32) exercising the lane-folding path.
    F2 = 32
    means_s = jax.random.normal(km, (F2,), dtype=jnp.float32)
    stds_s = jax.random.uniform(ks, (F2,), minval=0.5, maxval=2.0, dtype=jnp.float32)
    x4 = jax.random.normal(kx4, (2, 8, F2), dtype=jnp.float32)
    out4 = normalization(x4, means_s, stds_s)
    jax.block_until_ready(out4)
    ref4 = _reference(x4, means_s, stds_s)
    assert jnp.allclose(out4, ref4, atol=1e-6, rtol=1e-6), "mismatch (small-F input)"

    print("KERNEL_OK")
</pallas_src>

<mosaic_0001>
module attributes {stable_mosaic.version = 11 : i64} {
  func.func @_norm_kernel(%arg0: i32, %arg1: memref<8x128xf32, #tpu.memory_space<vmem>>, %arg2: memref<1x128xf32, #tpu.memory_space<vmem>>, %arg3: memref<1x128xf32, #tpu.memory_space<vmem>>, %arg4: memref<8x128xf32, #tpu.memory_space<vmem>>) attributes {dimension_semantics = [#tpu.dimension_semantics<parallel>], iteration_bounds = array<i64: 2>, scalar_prefetch = 0 : i64, scratch_operands = 0 : i64, tpu.core_type = #tpu.core_type<tc>, window_params = [{transform_indices = @transform_0, window_bounds = array<i64: 8, 128>}, {pipeline_mode = #tpu.pipeline_mode<synchronous>, transform_indices = @transform_1, window_bounds = array<i64: 1, 128>}, {pipeline_mode = #tpu.pipeline_mode<synchronous>, transform_indices = @transform_2, window_bounds = array<i64: 1, 128>}, {transform_indices = @transform_3, window_bounds = array<i64: 8, 128>}]} {
    %c0 = arith.constant 0 : index
    %c0_0 = arith.constant 0 : index
    %0 = vector.load %arg1[%c0, %c0_0] : memref<8x128xf32, #tpu.memory_space<vmem>>, vector<8x128xf32>
    %c0_1 = arith.constant 0 : index
    %c0_2 = arith.constant 0 : index
    %1 = vector.load %arg2[%c0_1, %c0_2] : memref<1x128xf32, #tpu.memory_space<vmem>>, vector<1x128xf32>
    %2 = vector.broadcast %1 : vector<1x128xf32> to vector<8x128xf32>
    %3 = arith.subf %0, %2 : vector<8x128xf32>
    %c0_3 = arith.constant 0 : index
    %c0_4 = arith.constant 0 : index
    %4 = vector.load %arg3[%c0_3, %c0_4] : memref<1x128xf32, #tpu.memory_space<vmem>>, vector<1x128xf32>
    %5 = vector.broadcast %4 : vector<1x128xf32> to vector<8x128xf32>
    %6 = arith.mulf %3, %5 : vector<8x128xf32>
    %c0_5 = arith.constant 0 : index
    %c0_6 = arith.constant 0 : index
    %7 = vector.load %arg4[%c0_5, %c0_6] : memref<8x128xf32, #tpu.memory_space<vmem>>, vector<8x128xf32>
    tpu.vector_store %arg4[%c0_5, %c0_6], %6 {strides = array<i32>} : memref<8x128xf32, #tpu.memory_space<vmem>>, vector<8x128xf32>,
    return
  }
  func.func @transform_0(%arg0: i32) -> (i32, i32) {
    %c0_i32 = arith.constant 0 : i32
    %c0_i32_0 = arith.constant 0 : i32
    return %arg0, %c0_i32 : i32, i32
  }
  func.func @transform_1(%arg0: i32) -> (i32, i32) {
    %c0_i32 = arith.constant 0 : i32
    %c0_i32_0 = arith.constant 0 : i32
    %c0_i32_1 = arith.constant 0 : i32
    return %c0_i32, %c0_i32_0 : i32, i32
  }
  func.func @transform_2(%arg0: i32) -> (i32, i32) {
    %c0_i32 = arith.constant 0 : i32
    %c0_i32_0 = arith.constant 0 : i32
    %c0_i32_1 = arith.constant 0 : i32
    return %c0_i32, %c0_i32_0 : i32, i32
  }
  func.func @transform_3(%arg0: i32) -> (i32, i32) {
    %c0_i32 = arith.constant 0 : i32
    %c0_i32_0 = arith.constant 0 : i32
    return %arg0, %c0_i32 : i32, i32
  }
}

</mosaic_0001>

<llo_original>
// kernel: tpu_custom_call.1
$region0: #{tpu_custom_call.1}
  #allocation0 [shape = 'u32[]', space=smem, size = 0x4, offset = 0x4, fixed_abs, tag = 'smem constant byte address 0x4 - core index']
  #allocation1 [shape = 'u32[144,128]{1,0:T(1,128)}', space=vmem, size = 0x12000, scoped, tag = 'internal scratch']
  %s0 = inlined_call_operand.hbm [shape: f32[16,128], index: 0, kind: input, shape index: {}]
  %s1 = inlined_call_operand.vmem [shape: f32[1,128], index: 1, kind: input, shape index: {}]
  %s2 = inlined_call_operand.vmem [shape: f32[1,128], index: 2, kind: input, shape index: {}]
  %s3 = inlined_call_operand.hbm [shape: f32[16,128], index: 3, kind: output, shape index: {}]
  %s4 = sld [smem:[#allocation0]]
  $region49: #{tpu_custom_call.1} parent=0
    _
  %s6 = ssub.s32 1, %s4
  %s7 = scalar_select 0, %s6, %s4
  $region1: #{tpu_custom_call.1} parent=0
    #allocation2 [shape = 'u8[8192]{0}', space=vmem, size = 0x2000, scoped, tag = 'input window, operand 0']
    #allocation3 [shape = 's32[2]{0}', space=sflag, size = 0x8, scoped, tag = 'scoped memory for tpu_custom_call.1']
    #allocation4 [shape = 's32[2]{0}', space=sflag, size = 0x8, scoped, tag = 'scoped memory for tpu_custom_call.1']
    #allocation5 [shape = 'u8[8192]{0}', space=vmem, size = 0x2000, scoped, tag = 'output window, operand 0']
    %8 = vsyncpa [#allocation3], 0
    %s9 = scalar_lea.sflag [#allocation3], 1
    %10 = vsyncpa %s9, 0
    %11 = vsyncpa [#allocation4], 0
    %s12 = scalar_lea.sflag [#allocation4], 1
    %13 = vsyncpa %s12, 0
    loop: start=0, step=1, limit=4
    $region2: #{tpu_custom_call.1} parent=1 // loop_pre_header
      _
    $region3: #{tpu_custom_call.1} parent=1 // loop_header
      %s15 = sphi 0, %s19
      %p16 = scmp.ge.s32.totalorder %s15, 4
      %s25 = sphi 0, %s27
      %s28 = sphi 0, %s25
      %s29 = sphi 0, %s28
      %s45 = sphi 0, %s29
      %s49 = sphi 0, %s49
      %s51 = sphi 0, %s49
      %s52 = sphi 0, %s51
      %s66 = sphi 0, %s52
      %s70 = sphi 0, %s70
      %s72 = sphi 0, %s70
      %s73 = sphi 0, %s72
      %s87 = sphi 0, %s73
      %s93 = sphi 0, %s95
      %s96 = sphi 0, %s93
      %s97 = sphi 0, %s96
      %s113 = sphi 0, %s97
    $region4: #{tpu_custom_call.1} parent=1 // loop_header_branch
      %18 = sbr.rel (%p16) target = $region8
    $region5: #{tpu_custom_call.1} parent=1 // loop_body
      %s20 = ssub.s32 %s15, 1
      %s21 = ssub.s32 %s15, 2
      %s22 = sadd.s32 %s15, 1
      %s23 = ssub.s32 %s15, %s22
      %p24 = scmp.eq.s32.totalorder %s23, 0
      %s26 = sadd.s32 %s25, 1
      %s27 = scalar_select %p24, %s25, %s26
      %p30 = pneg %p24
      %p31 = scmp.eq.s32.totalorder %s15, 1
      %p32 = por %p30, %p31
      %p33 = scmp.ne.s32.totalorder %s25, %s28
      %p34 = scmp.eq.s32.totalorder %s15, 0
      %p35 = por %p33, %p34
      %p36 = scmp.ne.s32.totalorder %s25, %s28
      %p37 = scmp.eq.s32.totalorder %s20, 1
      %p38 = por %p36, %p37
      %p39 = scmp.ne.s32.totalorder %s28, %s29
      %p40 = scmp.eq.s32.totalorder %s20, 0
      %p41 = por %p39, %p40
      %p42 = scmp.ne.s32.totalorder %s28, %s29
      %p43 = scmp.eq.s32.totalorder %s21, 1
      %p44 = por %p42, %p43
      %p46 = scmp.ne.s32.totalorder %s29, %s45
      %p47 = scmp.eq.s32.totalorder %s21, 0
      %p48 = por %p46, %p47
      %s50 = sadd.s32 %s49, 1
      %p53 = scmp.eq.s32.totalorder %s15, 1
      %p54 = scmp.ne.s32.totalorder %s49, %s51
      %p55 = scmp.eq.s32.totalorder %s15, 0
      %p56 = por %p54, %p55
      %p57 = scmp.ne.s32.totalorder %s49, %s51
      %p58 = scmp.eq.s32.totalorder %s20, 1
      %p59 = por %p57, %p58
      %p60 = scmp.ne.s32.totalorder %s51, %s52
      %p61 = scmp.eq.s32.totalorder %s20, 0
      %p62 = por %p60, %p61
      %p63 = scmp.ne.s32.totalorder %s51, %s52
      %p64 = scmp.eq.s32.totalorder %s21, 1
      %p65 = por %p63, %p64
      %p67 = scmp.ne.s32.totalorder %s52, %s66
      %p68 = scmp.eq.s32.totalorder %s21, 0
      %p69 = por %p67, %p68
      %s71 = sadd.s32 %s70, 1
      %p74 = scmp.eq.s32.totalorder %s15, 1
      %p75 = scmp.ne.s32.totalorder %s70, %s72
      %p76 = scmp.eq.s32.totalorder %s15, 0
      %p77 = por %p75, %p76
      %p78 = scmp.ne.s32.totalorder %s70, %s72
      %p79 = scmp.eq.s32.totalorder %s20, 1
      %p80 = por %p78, %p79
      %p81 = scmp.ne.s32.totalorder %s72, %s73
      %p82 = scmp.eq.s32.totalorder %s20, 0
      %p83 = por %p81, %p82
      %p84 = scmp.ne.s32.totalorder %s72, %s73
      %p85 = scmp.eq.s32.totalorder %s21, 1
      %p86 = por %p84, %p85
      %p88 = scmp.ne.s32.totalorder %s73, %s87
      %p89 = scmp.eq.s32.totalorder %s21, 0
      %p90 = por %p88, %p89
      %s91 = ssub.s32 %s15, %s22
      %p92 = scmp.eq.s32.totalorder %s91, 0
      %s94 = sadd.s32 %s93, 1
      %s95 = scalar_select %p92, %s93, %s94
      %p98 = pneg %p92
      %p99 = scmp.eq.s32.totalorder %s15, 1
      %p100 = por %p98, %p99
      %p101 = scmp.ne.s32.totalorder %s93, %s96
      %p102 = scmp.eq.s32.totalorder %s15, 0
      %p103 = por %p101, %p102
      %p104 = scmp.ne.s32.totalorder %s93, %s96
      %p105 = scmp.eq.s32.totalorder %s20, 1
      %p106 = por %p104, %p105
      %p107 = scmp.ne.s32.totalorder %s96, %s97
      %p108 = scmp.eq.s32.totalorder %s20, 0
      %p109 = por %p107, %p108
      %p110 = scmp.ne.s32.totalorder %s96, %s97
      %p111 = scmp.eq.s32.totalorder %s21, 1
      %p112 = por %p110, %p111
      %p114 = scmp.ne.s32.totalorder %s97, %s113
      %p115 = scmp.eq.s32.totalorder %s21, 0
      %p116 = por %p114, %p115
      %p117 = scmp.le.s32.totalorder 1, %s15
      %p118 = scmp.lt.s32.totalorder %s15, 3
      %p119 = pnand %p117, %p118
      %p120 = pneg %p119
      // Predicated region
      $region9: #{tpu_custom_call.1} parent=5 // pred_check
        _
      $region10: #{tpu_custom_call.1} parent=5 // pred_check_branch
        %122 = sbr.rel (%p119) target = $region12
      $region11: #{tpu_custom_call.1} parent=5 // pred_region
        %s123 = ssub.s32 %s15, 1
        // Predicated region
        $region13: #{tpu_custom_call.1} parent=11 // pred_check
          %p124 = pneg %p62
        $region14: #{tpu_custom_call.1} parent=11 // pred_check_branch
          %126 = sbr.rel (%p124) target = $region16
        $region15: #{tpu_custom_call.1} parent=11 // pred_region
          _
        $region16: #{tpu_custom_call.1} parent=11 // pred_fallthru
          _
        // Predicated region
        $region17: #{tpu_custom_call.1} parent=11 // pred_check
          %p127 = pneg %p83
        $region18: #{tpu_custom_call.1} parent=11 // pred_check_branch
          %129 = sbr.rel (%p127) target = $region20
        $region19: #{tpu_custom_call.1} parent=11 // pred_region
          _
        $region20: #{tpu_custom_call.1} parent=11 // pred_fallthru
          _
      $region12: #{tpu_custom_call.1} parent=5 // pred_fallthru
        _
      %p130 = scmp.lt.s32.totalorder %s15, 2
      // Predicated region
      $region21: #{tpu_custom_call.1} parent=5 // pred_check
        %p131 = pneg %p130
      $region22: #{tpu_custom_call.1} parent=5 // pred_check_branch
        %133 = sbr.rel (%p131) target = $region24
      $region23: #{tpu_custom_call.1} parent=5 // pred_region
        // Predicated region
        $region25: #{tpu_custom_call.1} parent=23 // pred_check
          %p134 = pneg %p35
        $region26: #{tpu_custom_call.1} parent=23 // pred_check_branch
          %136 = sbr.rel (%p134) target = $region28
        $region27: #{tpu_custom_call.1} parent=23 // pred_region
          %s137 = sand.u32 %s25, 1
          %s138 = scalar_lea.sflag [#allocation3], %s137
          %s139 = sand.u32 %s25, 1
          %s140 = smul.addr %s139, 8
          %s141 = scalar_lea.vmem [#allocation2], %s140
          %s143 = ssub.s32 128, 128
          %144 = vsyncadd %s138, %s143
          %s145 = smul.addr %s15, 128
          %s146 = scalar_lea.hbm %s0, %s145
          %s148 = sshll.u32 %s141, 4
          %s149 = int_to_ptr.vmem [resolvable:$true] %s148
          %151 = dma.hbm_to_vmem [thread:$0]  %s146, 128, %s149, %s138
        $region28: #{tpu_custom_call.1} parent=23 // pred_fallthru
          _
      $region24: #{tpu_custom_call.1} parent=5 // pred_fallthru
        _
      %p152 = scmp.le.s32.totalorder 1, %s15
      %p153 = scmp.lt.s32.totalorder %s15, 3
      %p154 = pnand %p152, %p153
      %p155 = pneg %p154
      // Predicated region
      $region29: #{tpu_custom_call.1} parent=5 // pred_check
        _
      $region30: #{tpu_custom_call.1} parent=5 // pred_check_branch
        %157 = sbr.rel (%p154) target = $region32
      $region31: #{tpu_custom_call.1} parent=5 // pred_region
        %s158 = ssub.s32 %s15, 1
        %s159 = sand.u32 %s28, 1
        %s160 = scalar_lea.sflag [#allocation3], %s159
        %s161 = sand.u32 %s28, 1
        %s162 = smul.addr %s161, 8
        %s163 = scalar_lea.vmem [#allocation2], %s162
        // Predicated region
        $region33: #{tpu_custom_call.1} parent=31 // pred_check
          %p164 = pneg %p41
        $region34: #{tpu_custom_call.1} parent=31 // pred_check_branch
          %166 = sbr.rel (%p164) target = $region36
        $region35: #{tpu_custom_call.1} parent=31 // pred_region
          %167 = dma.done %s160, 128
        $region36: #{tpu_custom_call.1} parent=31 // pred_fallthru
          _
        %s168 = sand.u32 %s28, 1
        %s169 = scalar_lea.sflag [#allocation3], %s168
        %s170 = sand.u32 %s28, 1
        %s171 = smul.addr %s170, 8
        %s172 = scalar_lea.vmem [#allocation2], %s171
        %p173 = pneg %p41
        %p174 = pneg %p38
        %p175 = pneg %p62
        %p176 = pneg %p59
        %p177 = pneg %p83
        %p178 = pneg %p80
        %p179 = pneg %p109
        %p180 = pneg %p106
        %s181 = sand.u32 %s96, 1
        %s182 = scalar_lea.sflag [#allocation4], %s181
        %s183 = sand.u32 %s96, 1
        %s184 = smul.addr %s183, 8
        %s185 = scalar_lea.vmem [#allocation5], %s184
        %v186 = vld [vmem:[%s163] sm:$0xff]
        %v187 = vld [vmem:[%s1] sm:$0x1]
        %v189 = vlaneseq
        %v190 = vshrl.u32 %v189, 7
        %v191 = vsub.s32 0, %v190
        %v192 = vrot.slane %v187, %v191
        %v194 = vsub.f32 %v186, %v192
        %v195 = vld [vmem:[%s2] sm:$0x1]
        %v197 = vlaneseq
        %v198 = vshrl.u32 %v197, 7
        %v199 = vsub.s32 0, %v198
        %v200 = vrot.slane %v195, %v199
        %v202 = vmul.f32 %v194, %v200
        %203 = vst [vmem:[%s185] sm:$0xff] %v202
        %s204 = sand.u32 %s96, 1
        %s205 = scalar_lea.sflag [#allocation4], %s204
        %s206 = sand.u32 %s96, 1
        %s207 = smul.addr %s206, 8
        %s208 = scalar_lea.vmem [#allocation5], %s207
        // Predicated region
        $region37: #{tpu_custom_call.1} parent=31 // pred_check
          %p209 = pneg %p106
        $region38: #{tpu_custom_call.1} parent=31 // pred_check_branch
          %211 = sbr.rel (%p209) target = $region40
        $region39: #{tpu_custom_call.1} parent=31 // pred_region
          %s213 = ssub.s32 128, 128
          %214 = vsyncadd %s205, %s213
          %s215 = smul.addr %s20, 128
          %s216 = scalar_lea.hbm %s3, %s215
          %s218 = sshll.u32 %s208, 4
          %s219 = int_to_ptr.vmem [resolvable:$true] %s218
          %221 = dma.vmem_to_hbm [thread:$0]  %s219, 128, %s216, %s205
        $region40: #{tpu_custom_call.1} parent=31 // pred_fallthru
          _
      $region32: #{tpu_custom_call.1} parent=5 // pred_fallthru
        _
      %p222 = scmp.le.s32.totalorder 2, %s15
      // Predicated region
      $region41: #{tpu_custom_call.1} parent=5 // pred_check
        %p223 = pneg %p222
      $region42: #{tpu_custom_call.1} parent=5 // pred_check_branch
        %225 = sbr.rel (%p223) target = $region44
      $region43: #{tpu_custom_call.1} parent=5 // pred_region
        %s226 = ssub.s32 %s15, 2
        // Predicated region
        $region45: #{tpu_custom_call.1} parent=43 // pred_check
          %p227 = pneg %p112
        $region46: #{tpu_custom_call.1} parent=43 // pred_check_branch
          %229 = sbr.rel (%p227) target = $region48
        $region47: #{tpu_custom_call.1} parent=43 // pred_region
          %s230 = sand.u32 %s97, 1
          %s231 = scalar_lea.sflag [#allocation4], %s230
          %s232 = sand.u32 %s97, 1
          %s233 = smul.addr %s232, 8
          %s234 = scalar_lea.vmem [#allocation5], %s233
          %235 = dma.done %s231, 128
        $region48: #{tpu_custom_call.1} parent=43 // pred_fallthru
          _
      $region44: #{tpu_custom_call.1} parent=5 // pred_fallthru
        _
    $region6: #{tpu_custom_call.1} parent=1 // loop_footer
      %s19 = sadd.s32 1, %s15
    $region7: #{tpu_custom_call.1} parent=1 // loop_footer_branch
      %14 = sbr.rel target = $region3
    $region8: #{tpu_custom_call.1} parent=1 // loop_exit
      _
    %236 = vsyncpa [#allocation3], 1
    %s237 = scalar_lea.sflag [#allocation3], 1
    %238 = vsyncpa %s237, 1
    %239 = vsyncpa [#allocation4], 1
    %s240 = scalar_lea.sflag [#allocation4], 1
    %241 = vsyncpa %s240, 1

</llo_original>
